<compile_context>
chip_gen: v7x
topology: tpu7x:2x2x1
jax: 0.10.0
libtpu: 0.0.40
codegen_flags: <defaults>
</compile_context>

<pallas_src>
import jax
import jax.numpy as jnp
from jax.experimental import pallas as pl
from jax.experimental.pallas import tpu as pltpu


def _extended_embeddings_kernel(x_sref, tok_ref, pos_ref, o_ref):
    # x_sref:  (B, S) int32 in SMEM (scalar prefetch) -- consumed only by the
    #          index_maps, unused in the body.
    # tok_ref: (1, 1, E) gathered token-embedding row for this (b, s).
    # pos_ref: (1, 1, E) position-embedding row for this s.
    # o_ref:   (1, 1, 1, E) output block for this (b, s).
    del x_sref
    o_ref[...] = (tok_ref[...] + pos_ref[...]).reshape(o_ref.shape)


def extended_embeddings(x, token_table, pos_table):
    """x: (B, S) int32; token_table: (A, E) f32; pos_table: (S, E) f32."""
    B, S = x.shape
    A, E = token_table.shape
    assert pos_table.shape == (S, E)

    # Present tables/output so the last two dims of every block equal the full
    # array dims (always layout-legal); leading dims carry the gather index.
    tok3 = token_table.reshape(A, 1, E)
    pos3 = pos_table.reshape(S, 1, E)

    grid_spec = pltpu.PrefetchScalarGridSpec(
        num_scalar_prefetch=1,          # x -> SMEM, feeds the index_maps
        grid=(B, S),
        in_specs=[
            # Row-gather: block row = x[b, s] of the token-embedding table.
            pl.BlockSpec((1, 1, E), lambda b, s, x_ref: (x_ref[b, s], 0, 0)),
            # Position row for sequence index s (never the whole table).
            pl.BlockSpec((1, 1, E), lambda b, s, x_ref: (s, 0, 0)),
        ],
        out_specs=pl.BlockSpec((1, 1, 1, E), lambda b, s, x_ref: (b, s, 0, 0)),
    )

    out = pl.pallas_call(
        _extended_embeddings_kernel,
        out_shape=jax.ShapeDtypeStruct((B, S, 1, E), jnp.float32),
        grid_spec=grid_spec,
        compiler_params=pltpu.CompilerParams(
            dimension_semantics=("parallel", "arbitrary")),
    )(x, tok3, pos3)
    return out.reshape(B, S, E)


if __name__ == "__main__":
    # Small, deterministic setup consistent with the module's __init__.
    alphabet_size = 6
    sequence_length = 8
    embedding_length = alphabet_size + sequence_length + 2  # = 16
    batch_size = 2

    key = jax.random.PRNGKey(0)
    k_tok, k_pos, k_x = jax.random.split(key, 3)

    # nn.Embedding default init ~ N(0, 1): deterministic synthetic weights.
    token_table = jax.random.normal(
        k_tok, (alphabet_size, embedding_length), dtype=jnp.float32)
    pos_table = jax.random.normal(
        k_pos, (sequence_length, embedding_length), dtype=jnp.float32)

    x = jax.random.randint(
        k_x, (batch_size, sequence_length), 0, alphabet_size, dtype=jnp.int32)

    out = jax.block_until_ready(extended_embeddings(x, token_table, pos_table))

    # Pure-JAX reference: token_table[X] + pos_table[arange(S)] (broadcast over batch)
    ref = jnp.take(token_table, x, axis=0) + pos_table[None, :, :]
    assert out.shape == (batch_size, sequence_length, embedding_length)
    assert jnp.allclose(out, ref, atol=1e-5, rtol=1e-5)

    print("KERNEL_OK")
</pallas_src>

<mosaic_0001>
module attributes {stable_mosaic.version = 11 : i64} {
  func.func @_extended_embeddings_kernel(%arg0: i32, %arg1: i32, %arg2: memref<2x8xi32, #tpu.memory_space<smem>>, %arg3: memref<1x1x16xf32, #tpu.memory_space<vmem>>, %arg4: memref<1x1x16xf32, #tpu.memory_space<vmem>>, %arg5: memref<1x1x1x16xf32, #tpu.memory_space<vmem>>) attributes {dimension_semantics = [#tpu.dimension_semantics<parallel>, #tpu.dimension_semantics<arbitrary>], iteration_bounds = array<i64: 2, 8>, scalar_prefetch = 1 : i64, scratch_operands = 0 : i64, tpu.core_type = #tpu.core_type<tc>, window_params = [{transform_indices = @transform_0, window_bounds = array<i64: 1, 1, 16>}, {transform_indices = @transform_1, window_bounds = array<i64: 1, 1, 16>}, {transform_indices = @transform_2, window_bounds = array<i64: 1, 1, 1, 16>}]} {
    %c0 = arith.constant 0 : index
    %c0_0 = arith.constant 0 : index
    %c0_1 = arith.constant 0 : index
    %0 = vector.load %arg3[%c0, %c0_0, %c0_1] : memref<1x1x16xf32, #tpu.memory_space<vmem>>, vector<1x1x16xf32>
    %c0_2 = arith.constant 0 : index
    %c0_3 = arith.constant 0 : index
    %c0_4 = arith.constant 0 : index
    %1 = vector.load %arg4[%c0_2, %c0_3, %c0_4] : memref<1x1x16xf32, #tpu.memory_space<vmem>>, vector<1x1x16xf32>
    %2 = arith.addf %0, %1 : vector<1x1x16xf32>
    %3 = vector.shape_cast %2 : vector<1x1x16xf32> to vector<1x1x1x16xf32>
    %c0_5 = arith.constant 0 : index
    %c0_6 = arith.constant 0 : index
    %c0_7 = arith.constant 0 : index
    %c0_8 = arith.constant 0 : index
    %4 = vector.load %arg5[%c0_5, %c0_6, %c0_7, %c0_8] : memref<1x1x1x16xf32, #tpu.memory_space<vmem>>, vector<1x1x1x16xf32>
    tpu.vector_store %arg5[%c0_5, %c0_6, %c0_7, %c0_8], %3 {strides = array<i32>} : memref<1x1x1x16xf32, #tpu.memory_space<vmem>>, vector<1x1x1x16xf32>,
    return
  }
  func.func @transform_0(%arg0: i32, %arg1: i32, %arg2: memref<2x8xi32, #tpu.memory_space<smem>>) -> (i32, i32, i32) {
    %0 = arith.index_cast %arg0 : i32 to index
    %1 = arith.index_cast %arg1 : i32 to index
    %2 = memref.load %arg2[%0, %1] : memref<2x8xi32, #tpu.memory_space<smem>>
    %c0_i32 = arith.constant 0 : i32
    %c0_i32_0 = arith.constant 0 : i32
    %c0_i32_1 = arith.constant 0 : i32
    return %2, %c0_i32, %c0_i32_0 : i32, i32, i32
  }
  func.func @transform_1(%arg0: i32, %arg1: i32, %arg2: memref<2x8xi32, #tpu.memory_space<smem>>) -> (i32, i32, i32) {
    %c0_i32 = arith.constant 0 : i32
    %c0_i32_0 = arith.constant 0 : i32
    %c0_i32_1 = arith.constant 0 : i32
    return %arg1, %c0_i32, %c0_i32_0 : i32, i32, i32
  }
  func.func @transform_2(%arg0: i32, %arg1: i32, %arg2: memref<2x8xi32, #tpu.memory_space<smem>>) -> (i32, i32, i32, i32) {
    %c0_i32 = arith.constant 0 : i32
    %c0_i32_0 = arith.constant 0 : i32
    %c0_i32_1 = arith.constant 0 : i32
    return %arg0, %arg1, %c0_i32, %c0_i32_0 : i32, i32, i32, i32
  }
}

</mosaic_0001>

<llo_original>
// kernel: tpu_custom_call.1
$region0: #{tpu_custom_call.1}
  #allocation0 [shape = 'u32[]', space=smem, size = 0x4, offset = 0x4, fixed_abs, tag = 'smem constant byte address 0x4 - core index']
  #allocation1 [shape = 'u32[144,128]{1,0:T(1,128)}', space=vmem, size = 0x12000, scoped, tag = 'internal scratch']
  #allocation2 [shape = 's32[1]{0}', space=sflag, size = 0x4, scoped, tag = 'scoped memory for tpu_custom_call.1']
  #allocation3 [shape = 'u8[1024]{0}', space=smem, size = 0x400, scoped, tag = 'prefetched SMEM operand 0']
  %s0 = inlined_call_operand.hbm [shape: s32[2,8], index: 0, kind: input, shape index: {}]
  %s1 = inlined_call_operand.hbm [shape: f32[6,1,16], index: 1, kind: input, shape index: {}]
  %s2 = inlined_call_operand.hbm [shape: f32[8,1,16], index: 2, kind: input, shape index: {}]
  %s3 = inlined_call_operand.hbm [shape: f32[2,8,1,16], index: 3, kind: output, shape index: {}]
  %s4 = sld [smem:[#allocation0]]
  $region49: #{tpu_custom_call.1} parent=0
    _
  %s6 = ssub.s32 1, %s4
  %s7 = scalar_select 0, %s6, %s4
  %9 = dma.hbm_to_smem %s0, 32, [#allocation3], [#allocation2]
  %10 = dma.done [#allocation2], 32
  %11 = sfence
  $region1: #{tpu_custom_call.1} parent=0
    #allocation4 [shape = 'u8[1024]{0}', space=vmem, size = 0x400, scoped, tag = 'input window, operand 1']
    #allocation5 [shape = 's32[2]{0}', space=sflag, size = 0x8, scoped, tag = 'scoped memory for tpu_custom_call.1']
    #allocation6 [shape = 's32[2]{0}', space=sflag, size = 0x8, scoped, tag = 'scoped memory for tpu_custom_call.1']
    #allocation7 [shape = 'u8[1024]{0}', space=vmem, size = 0x400, scoped, tag = 'input window, operand 2']
    #allocation8 [shape = 's32[2]{0}', space=sflag, size = 0x8, scoped, tag = 'scoped memory for tpu_custom_call.1']
    #allocation9 [shape = 'u8[1024]{0}', space=vmem, size = 0x400, scoped, tag = 'output window, operand 0']
    %12 = vsyncpa [#allocation5], 0
    %s13 = scalar_lea.sflag [#allocation5], 1
    %14 = vsyncpa %s13, 0
    %15 = vsyncpa [#allocation8], 0
    %s16 = scalar_lea.sflag [#allocation8], 1
    %17 = vsyncpa %s16, 0
    %18 = vsyncpa [#allocation6], 0
    %s19 = scalar_lea.sflag [#allocation6], 1
    %20 = vsyncpa %s19, 0
    loop: start=0, step=1, limit=18
    $region2: #{tpu_custom_call.1} parent=1 // loop_pre_header
      _
    $region3: #{tpu_custom_call.1} parent=1 // loop_header
      %s22 = sphi 0, %s26
      %p23 = scmp.ge.s32.totalorder %s22, 18
      %s29 = sphi 0, %s41
      %s30 = sphi 0, %s37
      %s31 = sphi 0, %s29
      %s32 = sphi 0, %s30
      %s33 = sphi 0, %s31
      %s34 = sphi 0, %s32
      %s60 = sphi 0, %s62
      %s63 = sphi 0, %s60
      %s64 = sphi 0, %s63
      %s80 = sphi 0, %s64
      %s86 = sphi 0, %s88
      %s89 = sphi 0, %s86
      %s90 = sphi 0, %s89
      %s106 = sphi 0, %s90
      %s114 = sphi 0, %s116
      %s117 = sphi 0, %s114
      %s118 = sphi 0, %s117
      %s134 = sphi 0, %s118
    $region4: #{tpu_custom_call.1} parent=1 // loop_header_branch
      %25 = sbr.rel (%p23) target = $region8
    $region5: #{tpu_custom_call.1} parent=1 // loop_body
      %s27 = ssub.s32 %s22, 1
      %s28 = ssub.s32 %s22, 2
      %s35 = sadd.s32 1, %s30
      %p36 = scmp.ge.s32.totalorder %s35, 8
      %s37 = scalar_select %p36, 0, %s35
      %s38 = sadd.s32 1, %s29
      %s39 = scalar_select %p36, %s38, %s29
      %p40 = scmp.ge.s32.totalorder %s39, 2
      %s41 = scalar_select %p40, 0, %s39
      %s42 = sshra.s32 %s30, 7
      %s43 = sand.u32 %s30, 127
      %s44 = sadd.s32 %s42, %s29
      %s45 = smul.u32 %s44, 128
      %s46 = sshra.s32 %s30, 7
      %s47 = sand.u32 %s30, 127
      %s48 = sadd.s32 %s45, %s47
      %s49 = sld [smem:[#allocation3 + %s48]]
      %s50 = sshra.s32 %s37, 7
      %s51 = sand.u32 %s37, 127
      %s52 = sadd.s32 %s50, %s41
      %s53 = smul.u32 %s52, 128
      %s54 = sshra.s32 %s37, 7
      %s55 = sand.u32 %s37, 127
      %s56 = sadd.s32 %s53, %s55
      %s57 = sld [smem:[#allocation3 + %s56]]
      %s58 = ssub.s32 %s49, %s57
      %p59 = scmp.eq.s32.totalorder %s58, 0
      %s61 = sadd.s32 %s60, 1
      %s62 = scalar_select %p59, %s60, %s61
      %p65 = pneg %p59
      %p66 = scmp.eq.s32.totalorder %s22, 15
      %p67 = por %p65, %p66
      %p68 = scmp.ne.s32.totalorder %s60, %s63
      %p69 = scmp.eq.s32.totalorder %s22, 0
      %p70 = por %p68, %p69
      %p71 = scmp.ne.s32.totalorder %s60, %s63
      %p72 = scmp.eq.s32.totalorder %s27, 15
      %p73 = por %p71, %p72
      %p74 = scmp.ne.s32.totalorder %s63, %s64
      %p75 = scmp.eq.s32.totalorder %s27, 0
      %p76 = por %p74, %p75
      %p77 = scmp.ne.s32.totalorder %s63, %s64
      %p78 = scmp.eq.s32.totalorder %s28, 15
      %p79 = por %p77, %p78
      %p81 = scmp.ne.s32.totalorder %s64, %s80
      %p82 = scmp.eq.s32.totalorder %s28, 0
      %p83 = por %p81, %p82
      %s84 = ssub.s32 %s30, %s37
      %p85 = scmp.eq.s32.totalorder %s84, 0
      %s87 = sadd.s32 %s86, 1
      %s88 = scalar_select %p85, %s86, %s87
      %p91 = pneg %p85
      %p92 = scmp.eq.s32.totalorder %s22, 15
      %p93 = por %p91, %p92
      %p94 = scmp.ne.s32.totalorder %s86, %s89
      %p95 = scmp.eq.s32.totalorder %s22, 0
      %p96 = por %p94, %p95
      %p97 = scmp.ne.s32.totalorder %s86, %s89
      %p98 = scmp.eq.s32.totalorder %s27, 15
      %p99 = por %p97, %p98
      %p100 = scmp.ne.s32.totalorder %s89, %s90
      %p101 = scmp.eq.s32.totalorder %s27, 0
      %p102 = por %p100, %p101
      %p103 = scmp.ne.s32.totalorder %s89, %s90
      %p104 = scmp.eq.s32.totalorder %s28, 15
      %p105 = por %p103, %p104
      %p107 = scmp.ne.s32.totalorder %s90, %s106
      %p108 = scmp.eq.s32.totalorder %s28, 0
      %p109 = por %p107, %p108
      %s110 = ssub.s32 %s29, %s41
      %s111 = ssub.s32 %s30, %s37
      %s112 = sor.u32 %s110, %s111
      %p113 = scmp.eq.s32.totalorder %s112, 0
      %s115 = sadd.s32 %s114, 1
      %s116 = scalar_select %p113, %s114, %s115
      %p119 = pneg %p113
      %p120 = scmp.eq.s32.totalorder %s22, 15
      %p121 = por %p119, %p120
      %p122 = scmp.ne.s32.totalorder %s114, %s117
      %p123 = scmp.eq.s32.totalorder %s22, 0
      %p124 = por %p122, %p123
      %p125 = scmp.ne.s32.totalorder %s114, %s117
      %p126 = scmp.eq.s32.totalorder %s27, 15
      %p127 = por %p125, %p126
      %p128 = scmp.ne.s32.totalorder %s117, %s118
      %p129 = scmp.eq.s32.totalorder %s27, 0
      %p130 = por %p128, %p129
      %p131 = scmp.ne.s32.totalorder %s117, %s118
      %p132 = scmp.eq.s32.totalorder %s28, 15
      %p133 = por %p131, %p132
      %p135 = scmp.ne.s32.totalorder %s118, %s134
      %p136 = scmp.eq.s32.totalorder %s28, 0
      %p137 = por %p135, %p136
      %p138 = scmp.le.s32.totalorder 1, %s22
      %p139 = scmp.lt.s32.totalorder %s22, 17
      %p140 = pnand %p138, %p139
      %p141 = pneg %p140
      // Predicated region
      $region9: #{tpu_custom_call.1} parent=5 // pred_check
        _
      $region10: #{tpu_custom_call.1} parent=5 // pred_check_branch
        %143 = sbr.rel (%p140) target = $region12
      $region11: #{tpu_custom_call.1} parent=5 // pred_region
        %s144 = ssub.s32 %s22, 1
      $region12: #{tpu_custom_call.1} parent=5 // pred_fallthru
        _
      %p145 = scmp.lt.s32.totalorder %s22, 16
      // Predicated region
      $region13: #{tpu_custom_call.1} parent=5 // pred_check
        %p146 = pneg %p145
      $region14: #{tpu_custom_call.1} parent=5 // pred_check_branch
        %148 = sbr.rel (%p146) target = $region16
      $region15: #{tpu_custom_call.1} parent=5 // pred_region
        // Predicated region
        $region17: #{tpu_custom_call.1} parent=15 // pred_check
          %p149 = pneg %p70
        $region18: #{tpu_custom_call.1} parent=15 // pred_check_branch
          %151 = sbr.rel (%p149) target = $region20
        $region19: #{tpu_custom_call.1} parent=15 // pred_region
          %s152 = sand.u32 %s60, 1
          %s153 = scalar_lea.sflag [#allocation5], %s152
          %s154 = sand.u32 %s60, 1
          %s155 = scalar_lea.vmem [#allocation4], %s154
          %s156 = sshra.s32 %s30, 7
          %s157 = sand.u32 %s30, 127
          %s158 = sadd.s32 %s156, %s29
          %s159 = smul.u32 %s158, 128
          %s160 = sshra.s32 %s30, 7
          %s161 = sand.u32 %s30, 127
          %s162 = sadd.s32 %s159, %s161
          %s163 = sld [smem:[#allocation3 + %s162]]
          %s165 = ssub.s32 16, 16
          %166 = vsyncadd %s153, %s165
          %s167 = smul.addr %s163, 16
          %s168 = scalar_lea.hbm %s1, %s167
          %s170 = sshll.u32 %s155, 4
          %s171 = int_to_ptr.vmem [resolvable:$true] %s170
          %173 = dma.hbm_to_vmem [thread:$0]  %s168, 16, %s171, %s153
        $region20: #{tpu_custom_call.1} parent=15 // pred_fallthru
          _
        // Predicated region
        $region21: #{tpu_custom_call.1} parent=15 // pred_check
          %p174 = pneg %p96
        $region22: #{tpu_custom_call.1} parent=15 // pred_check_branch
          %176 = sbr.rel (%p174) target = $region24
        $region23: #{tpu_custom_call.1} parent=15 // pred_region
          %s177 = sand.u32 %s86, 1
          %s178 = scalar_lea.sflag [#allocation8], %s177
          %s179 = sand.u32 %s86, 1
          %s180 = scalar_lea.vmem [#allocation7], %s179
          %s182 = ssub.s32 16, 16
          %183 = vsyncadd %s178, %s182
          %s184 = smul.addr %s30, 16
          %s185 = scalar_lea.hbm %s2, %s184
          %s187 = sshll.u32 %s180, 4
          %s188 = int_to_ptr.vmem [resolvable:$true] %s187
          %190 = dma.hbm_to_vmem [thread:$0]  %s185, 16, %s188, %s178
        $region24: #{tpu_custom_call.1} parent=15 // pred_fallthru
          _
      $region16: #{tpu_custom_call.1} parent=5 // pred_fallthru
        _
      %p191 = scmp.le.s32.totalorder 1, %s22
      %p192 = scmp.lt.s32.totalorder %s22, 17
      %p193 = pnand %p191, %p192
      %p194 = pneg %p193
      // Predicated region
      $region25: #{tpu_custom_call.1} parent=5 // pred_check
        _
      $region26: #{tpu_custom_call.1} parent=5 // pred_check_branch
        %196 = sbr.rel (%p193) target = $region28
      $region27: #{tpu_custom_call.1} parent=5 // pred_region
        %s197 = ssub.s32 %s22, 1
        %s198 = sand.u32 %s63, 1
        %s199 = scalar_lea.sflag [#allocation5], %s198
        %s200 = sand.u32 %s63, 1
        %s201 = scalar_lea.vmem [#allocation4], %s200
        // Predicated region
        $region29: #{tpu_custom_call.1} parent=27 // pred_check
          %p202 = pneg %p76
        $region30: #{tpu_custom_call.1} parent=27 // pred_check_branch
          %204 = sbr.rel (%p202) target = $region32
        $region31: #{tpu_custom_call.1} parent=27 // pred_region
          %205 = dma.done %s199, 16
        $region32: #{tpu_custom_call.1} parent=27 // pred_fallthru
          _
        %s206 = sand.u32 %s89, 1
        %s207 = scalar_lea.sflag [#allocation8], %s206
        %s208 = sand.u32 %s89, 1
        %s209 = scalar_lea.vmem [#allocation7], %s208
        // Predicated region
        $region33: #{tpu_custom_call.1} parent=27 // pred_check
          %p210 = pneg %p102
        $region34: #{tpu_custom_call.1} parent=27 // pred_check_branch
          %212 = sbr.rel (%p210) target = $region36
        $region35: #{tpu_custom_call.1} parent=27 // pred_region
          %213 = dma.done %s207, 16
        $region36: #{tpu_custom_call.1} parent=27 // pred_fallthru
          _
        %s214 = sand.u32 %s63, 1
        %s215 = scalar_lea.sflag [#allocation5], %s214
        %s216 = sand.u32 %s63, 1
        %s217 = scalar_lea.vmem [#allocation4], %s216
        %p218 = pneg %p76
        %p219 = pneg %p73
        %s220 = sand.u32 %s89, 1
        %s221 = scalar_lea.sflag [#allocation8], %s220
        %s222 = sand.u32 %s89, 1
        %s223 = scalar_lea.vmem [#allocation7], %s222
        %p224 = pneg %p102
        %p225 = pneg %p99
        %p226 = pneg %p130
        %p227 = pneg %p127
        %s228 = sand.u32 %s117, 1
        %s229 = scalar_lea.sflag [#allocation6], %s228
        %s230 = sand.u32 %s117, 1
        %s231 = scalar_lea.vmem [#allocation9], %s230
        %s232 = sshra.s32 %s32, 7
        %s233 = sand.u32 %s32, 127
        %s234 = sadd.s32 %s232, %s31
        %s235 = smul.u32 %s234, 128
        %s236 = sshra.s32 %s32, 7
        %s237 = sand.u32 %s32, 127
        %s238 = sadd.s32 %s235, %s237
        %s239 = sld [smem:[#allocation3 + %s238]]
        %v240 = vld [vmem:[%s201] sm:$0x1]
        %v241 = vld [vmem:[%s209] sm:$0x1]
        %v242 = vadd.f32 %v240, %v241
        %vm243 = vcmask 122880
        %244 = vst.msk [vmem:[%s231] sm:$0x1] %vm243, %v242
        %s245 = sand.u32 %s117, 1
        %s246 = scalar_lea.sflag [#allocation6], %s245
        %s247 = sand.u32 %s117, 1
        %s248 = scalar_lea.vmem [#allocation9], %s247
        // Predicated region
        $region37: #{tpu_custom_call.1} parent=27 // pred_check
          %p249 = pneg %p127
        $region38: #{tpu_custom_call.1} parent=27 // pred_check_branch
          %251 = sbr.rel (%p249) target = $region40
        $region39: #{tpu_custom_call.1} parent=27 // pred_region
          %s253 = ssub.s32 16, 16
          %254 = vsyncadd %s246, %s253
          %s255 = smul.addr %s31, 8
          %s256 = sadd.s32 %s32, %s255
          %s257 = smul.addr %s256, 16
          %s258 = scalar_lea.hbm %s3, %s257
          %s260 = sshll.u32 %s248, 4
          %s261 = int_to_ptr.vmem [resolvable:$true] %s260
          %263 = dma.vmem_to_hbm [thread:$0]  %s261, 16, %s258, %s246
        $region40: #{tpu_custom_call.1} parent=27 // pred_fallthru
          _
      $region28: #{tpu_custom_call.1} parent=5 // pred_fallthru
        _
      %p264 = scmp.le.s32.totalorder 2, %s22
      // Predicated region
      $region41: #{tpu_custom_call.1} parent=5 // pred_check
        %p265 = pneg %p264
      $region42: #{tpu_custom_call.1} parent=5 // pred_check_branch
        %267 = sbr.rel (%p265) target = $region44
      $region43: #{tpu_custom_call.1} parent=5 // pred_region
        %s268 = ssub.s32 %s22, 2
        // Predicated region
        $region45: #{tpu_custom_call.1} parent=43 // pred_check
          %p269 = pneg %p133
        $region46: #{tpu_custom_call.1} parent=43 // pred_check_branch
          %271 = sbr.rel (%p269) target = $region48
        $region47: #{tpu_custom_call.1} parent=43 // pred_region
          %s272 = sand.u32 %s118, 1
          %s273 = scalar_lea.sflag [#allocation6], %s272
          %s274 = sand.u32 %s118, 1
          %s275 = scalar_lea.vmem [#allocation9], %s274
          %276 = dma.done %s273, 16
        $region48: #{tpu_custom_call.1} parent=43 // pred_fallthru
          _
      $region44: #{tpu_custom_call.1} parent=5 // pred_fallthru
        _
    $region6: #{tpu_custom_call.1} parent=1 // loop_footer
      %s26 = sadd.s32 1, %s22
    $region7: #{tpu_custom_call.1} parent=1 // loop_footer_branch
      %21 = sbr.rel target = $region3
    $region8: #{tpu_custom_call.1} parent=1 // loop_exit
      _
    %277 = vsyncpa [#allocation5], 1
    %s278 = scalar_lea.sflag [#allocation5], 1
    %279 = vsyncpa %s278, 1
    %280 = vsyncpa [#allocation8], 1
    %s281 = scalar_lea.sflag [#allocation8], 1
    %282 = vsyncpa %s281, 1
    %283 = vsyncpa [#allocation6], 1
    %s284 = scalar_lea.sflag [#allocation6], 1
    %285 = vsyncpa %s284, 1

</llo_original>
